<compile_context>
chip_gen: v6e
topology: v6e:2x2x1
jax: 0.10.0
libtpu: 0.0.40
codegen_flags: <defaults>
</compile_context>

<pallas_src>
import jax
import jax.numpy as jnp
from jax import lax
from jax.experimental import pallas as pl
from jax.experimental.pallas import tpu as pltpu


def _spatial_attention_kernel(x_ref, a_ref, o_ref):
    # x_ref: (B, C, P)  zero-padded, flattened, lane-padded input planes (P = pad128(Hp*Wp))
    # a_ref: (2, P, HW) conv matrices (slab 0 -> avg plane, slab 1 -> max plane)
    # o_ref: (B, HW)    sigmoid(conv) output
    x = x_ref[...]                                    # (B, C, P) f32
    avg = jnp.mean(x, axis=1)                         # (B, P)  channel mean
    mx = jnp.max(x, axis=1)                           # (B, P)  channel max
    conv = (jnp.dot(avg, a_ref[0, :, :], preferred_element_type=jnp.float32)
            + jnp.dot(mx, a_ref[1, :, :], preferred_element_type=jnp.float32))  # (B, HW)
    o_ref[...] = 1.0 / (1.0 + jnp.exp(-conv))         # sigmoid


def _build_conv_matrices(weight, H, W):
    """Turn the (1, 2, K, K) OIHW conv weight into two (P_pad, H*W) matrices so the
    7x7 SAME cross-correlation over a zero-padded, row-major-flattened plane becomes
    a single matmul per plane.  Pure layout/weight plumbing, done once in the wrapper."""
    _, Cp, K, _ = weight.shape                        # Cp == 2
    pad = (K - 1) // 2
    Hp, Wp = H + 2 * pad, W + 2 * pad
    P = Hp * Wp
    P_pad = ((P + 127) // 128) * 128                  # lane-align the K dim of the matmul

    c = jnp.arange(Cp)[:, None, None, None, None]     # (2,1,1,1,1)
    dy = jnp.arange(K)[None, :, None, None, None]     # (1,K,1,1,1)
    dx = jnp.arange(K)[None, None, :, None, None]     # (1,1,K,1,1)
    y = jnp.arange(H)[None, None, None, :, None]      # (1,1,1,H,1)
    x = jnp.arange(W)[None, None, None, None, :]      # (1,1,1,1,W)

    rows = c * P_pad + (y + dy) * Wp + (x + dx)       # (2,K,K,H,W) padded-input index
    cols = jnp.broadcast_to(y * W + x, rows.shape)    # (2,K,K,H,W) output-pixel index
    vals = jnp.broadcast_to(weight[0][:, :, :, None, None], rows.shape)

    A = jnp.zeros((Cp * P_pad, H * W), jnp.float32)
    A = A.at[rows.reshape(-1), cols.reshape(-1)].set(vals.reshape(-1).astype(jnp.float32))
    return A.reshape(Cp, P_pad, H * W), pad, P, P_pad


def spatial_attention(x_nchw, weight, *, block_b=128):
    """Pallas forward pass.  x_nchw: (N, C, H, W) f32, weight: (1, 2, K, K) -> (N, 1, H, W)."""
    N, C, H, W = x_nchw.shape
    HW = H * W

    A, pad, P, P_pad = _build_conv_matrices(weight, H, W)

    x = x_nchw.astype(jnp.float32)
    x_sp = jnp.pad(x, ((0, 0), (0, 0), (pad, pad), (pad, pad)))        # spatial SAME pad
    x_flat = x_sp.reshape(N, C, P)
    x_flat = jnp.pad(x_flat, ((0, 0), (0, 0), (0, P_pad - P)))          # lane pad (zeros)

    B = min(N, block_b)                               # batch block per grid step
    grid = (pl.cdiv(N, B),)

    out = pl.pallas_call(
        _spatial_attention_kernel,
        out_shape=jax.ShapeDtypeStruct((N, HW), jnp.float32),
        grid_spec=pltpu.PrefetchScalarGridSpec(
            num_scalar_prefetch=0,
            grid=grid,
            in_specs=[
                pl.BlockSpec((B, C, P_pad), lambda n: (n, 0, 0)),
                pl.BlockSpec((2, P_pad, HW), lambda n: (0, 0, 0)),
            ],
            out_specs=pl.BlockSpec((B, HW), lambda n: (n, 0)),
        ),
        compiler_params=pltpu.CompilerParams(
            dimension_semantics=("parallel",)),       # batch axis -> both TCs on v7x
    )(x_flat, A)

    return out.reshape(N, 1, H, W)


def init_weight(key, kernel_size=7):
    """PyTorch Conv2d(2, 1, k, bias=False) default init: uniform(+-1/sqrt(fan_in))."""
    fan_in = 2 * kernel_size * kernel_size
    bound = 1.0 / jnp.sqrt(jnp.float32(fan_in))
    return jax.random.uniform(key, (1, 2, kernel_size, kernel_size),
                              jnp.float32, -bound, bound)


def reference_forward(x_nchw, weight):
    """Pure-JAX reference matching the PyTorch module semantics."""
    x = x_nchw.astype(jnp.float32)
    avg = jnp.mean(x, axis=1, keepdims=True)
    mx = jnp.max(x, axis=1, keepdims=True)
    cat = jnp.concatenate([avg, mx], axis=1)          # (N, 2, H, W)
    K = weight.shape[-1]
    pad = (K - 1) // 2
    conv = lax.conv_general_dilated(
        cat, weight.astype(jnp.float32), window_strides=(1, 1),
        padding=((pad, pad), (pad, pad)),
        dimension_numbers=('NCHW', 'OIHW', 'NCHW'))
    return jax.nn.sigmoid(conv)


if __name__ == "__main__":
    key = jax.random.PRNGKey(0)
    k_w, k_x = jax.random.split(key)

    N, C, H, W = 2, 4, 16, 16
    KSZ = 7

    weight = init_weight(k_w, KSZ)
    x = jax.random.normal(k_x, (N, C, H, W), jnp.float32)

    out = jax.block_until_ready(spatial_attention(x, weight))
    ref = jax.block_until_ready(reference_forward(x, weight))

    assert out.shape == (N, 1, H, W), out.shape
    assert jnp.allclose(out, ref, atol=1e-5, rtol=1e-5), (out, ref)
    print("KERNEL_OK")
</pallas_src>

<mosaic_0001>
module attributes {stable_mosaic.version = 11 : i64} {
  func.func @_spatial_attention_kernel(%arg0: i32, %arg1: memref<2x4x512xf32, #tpu.memory_space<vmem>>, %arg2: memref<2x512x256xf32, #tpu.memory_space<vmem>>, %arg3: memref<2x256xf32, #tpu.memory_space<vmem>>) attributes {dimension_semantics = [#tpu.dimension_semantics<parallel>], iteration_bounds = array<i64: 1>, scalar_prefetch = 0 : i64, scratch_operands = 0 : i64, tpu.core_type = #tpu.core_type<tc>, window_params = [{transform_indices = @transform_0, window_bounds = array<i64: 2, 4, 512>}, {pipeline_mode = #tpu.pipeline_mode<synchronous>, transform_indices = @transform_1, window_bounds = array<i64: 2, 512, 256>}, {transform_indices = @transform_2, window_bounds = array<i64: 2, 256>}]} {
    %c0 = arith.constant 0 : index
    %c0_0 = arith.constant 0 : index
    %c0_1 = arith.constant 0 : index
    %0 = vector.load %arg1[%c0, %c0_0, %c0_1] : memref<2x4x512xf32, #tpu.memory_space<vmem>>, vector<2x4x512xf32>
    %cst = arith.constant dense<0.000000e+00> : vector<2x512xf32>
    %1 = vector.multi_reduction <add>, %0, %cst [1] : vector<2x4x512xf32> to vector<2x512xf32>
    %cst_2 = arith.constant 4.000000e+00 : f32
    %2 = vector.broadcast %cst_2 : f32 to vector<2x512xf32>
    %3 = arith.divf %1, %2 : vector<2x512xf32>
    %cst_3 = arith.constant dense<0xFF800000> : vector<2x512xf32>
    %4 = vector.multi_reduction <maximumf>, %0, %cst_3 [1] : vector<2x4x512xf32> to vector<2x512xf32>
    %c0_4 = arith.constant 0 : index
    %c0_5 = arith.constant 0 : index
    %c0_6 = arith.constant 0 : index
    %5 = vector.load %arg2[%c0_4, %c0_5, %c0_6] : memref<2x512x256xf32, #tpu.memory_space<vmem>>, vector<1x512x256xf32>
    %6 = vector.shape_cast %5 : vector<1x512x256xf32> to vector<512x256xf32>
    %cst_7 = arith.constant dense<0.000000e+00> : vector<2x256xf32>
    %7 = tpu.matmul %3, %6, %cst_7 {dimension_numbers = #tpu.dot_dimension_numbers<[1], [0], [0], [1], [0, 0, 1, 1], [], []>} : vector<2x512xf32>, vector<512x256xf32>, vector<2x256xf32> -> vector<2x256xf32>
    %c1 = arith.constant 1 : index
    %c0_8 = arith.constant 0 : index
    %c0_9 = arith.constant 0 : index
    %8 = vector.load %arg2[%c1, %c0_8, %c0_9] : memref<2x512x256xf32, #tpu.memory_space<vmem>>, vector<1x512x256xf32>
    %9 = vector.shape_cast %8 : vector<1x512x256xf32> to vector<512x256xf32>
    %cst_10 = arith.constant dense<0.000000e+00> : vector<2x256xf32>
    %10 = tpu.matmul %4, %9, %cst_10 {dimension_numbers = #tpu.dot_dimension_numbers<[1], [0], [0], [1], [0, 0, 1, 1], [], []>} : vector<2x512xf32>, vector<512x256xf32>, vector<2x256xf32> -> vector<2x256xf32>
    %11 = arith.addf %7, %10 : vector<2x256xf32>
    %cst_11 = arith.constant 0.000000e+00 : f32
    %12 = vector.broadcast %cst_11 : f32 to vector<2x256xf32>
    %13 = arith.subf %12, %11 : vector<2x256xf32>
    %14 = math.exp %13 : vector<2x256xf32>
    %cst_12 = arith.constant 1.000000e+00 : f32
    %15 = vector.broadcast %cst_12 : f32 to vector<2x256xf32>
    %16 = arith.addf %15, %14 : vector<2x256xf32>
    %cst_13 = arith.constant 1.000000e+00 : f32
    %17 = vector.broadcast %cst_13 : f32 to vector<2x256xf32>
    %18 = arith.divf %17, %16 : vector<2x256xf32>
    %c0_14 = arith.constant 0 : index
    %c0_15 = arith.constant 0 : index
    %19 = vector.load %arg3[%c0_14, %c0_15] : memref<2x256xf32, #tpu.memory_space<vmem>>, vector<2x256xf32>
    tpu.vector_store %arg3[%c0_14, %c0_15], %18 {strides = array<i32>} : memref<2x256xf32, #tpu.memory_space<vmem>>, vector<2x256xf32>,
    return
  }
  func.func @transform_0(%arg0: i32) -> (i32, i32, i32) {
    %c0_i32 = arith.constant 0 : i32
    %c0_i32_0 = arith.constant 0 : i32
    %c0_i32_1 = arith.constant 0 : i32
    return %arg0, %c0_i32, %c0_i32_0 : i32, i32, i32
  }
  func.func @transform_1(%arg0: i32) -> (i32, i32, i32) {
    %c0_i32 = arith.constant 0 : i32
    %c0_i32_0 = arith.constant 0 : i32
    %c0_i32_1 = arith.constant 0 : i32
    %c0_i32_2 = arith.constant 0 : i32
    return %c0_i32, %c0_i32_0, %c0_i32_1 : i32, i32, i32
  }
  func.func @transform_2(%arg0: i32) -> (i32, i32) {
    %c0_i32 = arith.constant 0 : i32
    %c0_i32_0 = arith.constant 0 : i32
    return %arg0, %c0_i32 : i32, i32
  }
}

</mosaic_0001>

<llo_original>
// kernel: tpu_custom_call.1
$region0: #{tpu_custom_call.1}
  #allocation0 [shape = 'u32[]', space=smem, size = 0x4, offset = 0x4, fixed_abs, tag = 'smem constant byte address 0x4 - core index']
  #allocation1 [shape = 'u32[144,128]{1,0:T(1,128)}', space=vmem, size = 0x12000, scoped, tag = 'internal scratch']
  %s0 = inlined_call_operand.hbm [shape: f32[2,4,512], index: 0, kind: input, shape index: {}]
  %s1 = inlined_call_operand.hbm [shape: f32[2,512,256], index: 1, kind: input, shape index: {}]
  %s2 = inlined_call_operand.hbm [shape: f32[2,256], index: 2, kind: output, shape index: {}]
  %s3 = sld [smem:[#allocation0]]
  $region26: #{tpu_custom_call.1} parent=0
    _
  %s5 = ssub.s32 1, %s3
  %s6 = scalar_select 0, %s5, %s3
  $region1: #{tpu_custom_call.1} parent=0
    #allocation2 [shape = 'u8[16384]{0}', space=vmem, size = 0x4000, scoped, tag = 'input window, operand 0, single buffered']
    #allocation3 [shape = 's32[1]{0}', space=sflag, size = 0x4, scoped, tag = 'scoped memory for tpu_custom_call.1']
    #allocation4 [shape = 's32[1]{0}', space=sflag, size = 0x4, scoped, tag = 'scoped memory for tpu_custom_call.1']
    #allocation5 [shape = 'u8[1048576]{0}', space=vmem, size = 0x100000, scoped, tag = 'input window, operand 1, single buffered']
    #allocation6 [shape = 's32[1]{0}', space=sflag, size = 0x4, scoped, tag = 'scoped memory for tpu_custom_call.1']
    #allocation7 [shape = 'u8[2048]{0}', space=vmem, size = 0x800, scoped, tag = 'output window, operand 0, single buffered']
    %7 = vsyncpa [#allocation3], 0
    %8 = vsyncpa [#allocation6], 0
    %9 = vsyncpa [#allocation4], 0
    // Predicated region
    $region2: #{tpu_custom_call.1} parent=1 // pred_check
      _
    $region3: #{tpu_custom_call.1} parent=1 // pred_check_branch
      %11 = sbr.rel (0) target = $region5
    $region4: #{tpu_custom_call.1} parent=1 // pred_region
      %s13 = ssub.s32 512, 512
      %14 = vsyncadd [#allocation3], %s13
      %s15 = sshll.u32 [#allocation2], 4
      %s16 = int_to_ptr.vmem [resolvable:$true] %s15
      %21 = dma.hbm_to_vmem [thread:$0]  %s0, 512, %s16, [#allocation3], 256, 256, 16
    $region5: #{tpu_custom_call.1} parent=1 // pred_fallthru
      _
    // Predicated region
    $region6: #{tpu_custom_call.1} parent=1 // pred_check
      _
    $region7: #{tpu_custom_call.1} parent=1 // pred_check_branch
      %23 = sbr.rel (0) target = $region9
    $region8: #{tpu_custom_call.1} parent=1 // pred_region
      %s25 = ssub.s32 32768, 32768
      %26 = vsyncadd [#allocation6], %s25
      %s27 = sshll.u32 [#allocation5], 4
      %s28 = int_to_ptr.vmem [resolvable:$true] %s27
      %33 = dma.hbm_to_vmem [thread:$0]  %s1, 32768, %s28, [#allocation6], 256, 256, 16
    $region9: #{tpu_custom_call.1} parent=1 // pred_fallthru
      _
    // Predicated region
    $region10: #{tpu_custom_call.1} parent=1 // pred_check
      _
    $region11: #{tpu_custom_call.1} parent=1 // pred_check_branch
      %35 = sbr.rel (0) target = $region13
    $region12: #{tpu_custom_call.1} parent=1 // pred_region
      %36 = dma.done [#allocation3], 512
    $region13: #{tpu_custom_call.1} parent=1 // pred_fallthru
      _
    // Predicated region
    $region14: #{tpu_custom_call.1} parent=1 // pred_check
      _
    $region15: #{tpu_custom_call.1} parent=1 // pred_check_branch
      %38 = sbr.rel (0) target = $region17
    $region16: #{tpu_custom_call.1} parent=1 // pred_region
      %39 = dma.done [#allocation6], 32768
    $region17: #{tpu_custom_call.1} parent=1 // pred_fallthru
      _
    %v40 = vld [vmem:[#allocation2] sm:$0xff]
    %v41 = vld [vmem:[#allocation2 + $0x8] sm:$0xff]
    %v42 = vld [vmem:[#allocation2 + $0x10] sm:$0xff]
    %v43 = vld [vmem:[#allocation2 + $0x18] sm:$0xff]
    %v48 = vcombine.high %v40, %v40
    %v49 = vcombine.high %v41, %v41
    %v50 = vcombine.high %v42, %v42
    %v51 = vcombine.high %v43, %v43
    %vm56 = vcmask 1043456
    %v57 = vsel %vm56, %v40, 0.0
    %v58 = vrot.slane %v57, 4
    %v59 = vadd.f32 %v57, %v58
    %v60 = vrot.slane %v59, 2
    %v61 = vadd.f32 %v59, %v60
    %v62 = vrot.slane %v61, 1
    %v63 = vadd.f32 %v61, %v62
    %v64 = vsel %vm56, %v48, 0.0
    %v65 = vrot.slane %v64, 4
    %v66 = vadd.f32 %v64, %v65
    %v67 = vrot.slane %v66, 2
    %v68 = vadd.f32 %v66, %v67
    %v69 = vrot.slane %v68, 1
    %v70 = vadd.f32 %v68, %v69
    %v71 = vsel %vm56, %v41, 0.0
    %v72 = vrot.slane %v71, 4
    %v73 = vadd.f32 %v71, %v72
    %v74 = vrot.slane %v73, 2
    %v75 = vadd.f32 %v73, %v74
    %v76 = vrot.slane %v75, 1
    %v77 = vadd.f32 %v75, %v76
    %v78 = vsel %vm56, %v49, 0.0
    %v79 = vrot.slane %v78, 4
    %v80 = vadd.f32 %v78, %v79
    %v81 = vrot.slane %v80, 2
    %v82 = vadd.f32 %v80, %v81
    %v83 = vrot.slane %v82, 1
    %v84 = vadd.f32 %v82, %v83
    %v85 = vsel %vm56, %v42, 0.0
    %v86 = vrot.slane %v85, 4
    %v87 = vadd.f32 %v85, %v86
    %v88 = vrot.slane %v87, 2
    %v89 = vadd.f32 %v87, %v88
    %v90 = vrot.slane %v89, 1
    %v91 = vadd.f32 %v89, %v90
    %v92 = vsel %vm56, %v50, 0.0
    %v93 = vrot.slane %v92, 4
    %v94 = vadd.f32 %v92, %v93
    %v95 = vrot.slane %v94, 2
    %v96 = vadd.f32 %v94, %v95
    %v97 = vrot.slane %v96, 1
    %v98 = vadd.f32 %v96, %v97
    %v99 = vsel %vm56, %v43, 0.0
    %v100 = vrot.slane %v99, 4
    %v101 = vadd.f32 %v99, %v100
    %v102 = vrot.slane %v101, 2
    %v103 = vadd.f32 %v101, %v102
    %v104 = vrot.slane %v103, 1
    %v105 = vadd.f32 %v103, %v104
    %v106 = vsel %vm56, %v51, 0.0
    %v107 = vrot.slane %v106, 4
    %v108 = vadd.f32 %v106, %v107
    %v109 = vrot.slane %v108, 2
    %v110 = vadd.f32 %v108, %v109
    %v111 = vrot.slane %v110, 1
    %v112 = vadd.f32 %v110, %v111
    %v113 = vrcp.pop 4.0
    %v114 = vmul.f32 %v63, %v113
    %v115 = vmul.f32 %v70, %v113
    %v116 = vmul.f32 %v77, %v113
    %v117 = vmul.f32 %v84, %v113
    %v118 = vmul.f32 %v91, %v113
    %v119 = vmul.f32 %v98, %v113
    %v120 = vmul.f32 %v105, %v113
    %v121 = vmul.f32 %v112, %v113
    %v122 = vsel %vm56, %v40, -inf
    %v123 = vrot.slane %v122, 4
    %v124 = vmax.f32 %v122, %v123
    %v125 = vrot.slane %v124, 2
    %v126 = vmax.f32 %v124, %v125
    %v127 = vrot.slane %v126, 1
    %v128 = vmax.f32 %v126, %v127
    %v129 = vsel %vm56, %v48, -inf
    %v130 = vrot.slane %v129, 4
    %v131 = vmax.f32 %v129, %v130
    %v132 = vrot.slane %v131, 2
    %v133 = vmax.f32 %v131, %v132
    %v134 = vrot.slane %v133, 1
    %v135 = vmax.f32 %v133, %v134
    %v136 = vsel %vm56, %v41, -inf
    %v137 = vrot.slane %v136, 4
    %v138 = vmax.f32 %v136, %v137
    %v139 = vrot.slane %v138, 2
    %v140 = vmax.f32 %v138, %v139
    %v141 = vrot.slane %v140, 1
    %v142 = vmax.f32 %v140, %v141
    %v143 = vsel %vm56, %v49, -inf
    %v144 = vrot.slane %v143, 4
    %v145 = vmax.f32 %v143, %v144
    %v146 = vrot.slane %v145, 2
    %v147 = vmax.f32 %v145, %v146
    %v148 = vrot.slane %v147, 1
    %v149 = vmax.f32 %v147, %v148
    %v150 = vsel %vm56, %v42, -inf
    %v151 = vrot.slane %v150, 4
    %v152 = vmax.f32 %v150, %v151
    %v153 = vrot.slane %v152, 2
    %v154 = vmax.f32 %v152, %v153
    %v155 = vrot.slane %v154, 1
    %v156 = vmax.f32 %v154, %v155
    %v157 = vsel %vm56, %v50, -inf
    %v158 = vrot.slane %v157, 4
    %v159 = vmax.f32 %v157, %v158
    %v160 = vrot.slane %v159, 2
    %v161 = vmax.f32 %v159, %v160
    %v162 = vrot.slane %v161, 1
    %v163 = vmax.f32 %v161, %v162
    %v164 = vsel %vm56, %v43, -inf
    %v165 = vrot.slane %v164, 4
    %v166 = vmax.f32 %v164, %v165
    %v167 = vrot.slane %v166, 2
    %v168 = vmax.f32 %v166, %v167
    %v169 = vrot.slane %v168, 1
    %v170 = vmax.f32 %v168, %v169
    %v171 = vsel %vm56, %v51, -inf
    %v172 = vrot.slane %v171, 4
    %v173 = vmax.f32 %v171, %v172
    %v174 = vrot.slane %v173, 2
    %v175 = vmax.f32 %v173, %v174
    %v176 = vrot.slane %v175, 1
    %v177 = vmax.f32 %v175, %v176
    %v178 = vld [vmem:[#allocation5] sm:$0xff]
    %v179 = vld [vmem:[#allocation5 + $0x8] sm:$0xff]
    %v180 = vld [vmem:[#allocation5 + $0x10] sm:$0xff]
    %v181 = vld [vmem:[#allocation5 + $0x18] sm:$0xff]
    %v182 = vld [vmem:[#allocation5 + $0x20] sm:$0xff]
    %v183 = vld [vmem:[#allocation5 + $0x28] sm:$0xff]
    %v184 = vld [vmem:[#allocation5 + $0x30] sm:$0xff]
    %v185 = vld [vmem:[#allocation5 + $0x38] sm:$0xff]
    %v186 = vld [vmem:[#allocation5 + $0x40] sm:$0xff]
    %v187 = vld [vmem:[#allocation5 + $0x48] sm:$0xff]
    %v188 = vld [vmem:[#allocation5 + $0x50] sm:$0xff]
    %v189 = vld [vmem:[#allocation5 + $0x58] sm:$0xff]
    %v190 = vld [vmem:[#allocation5 + $0x60] sm:$0xff]
    %v191 = vld [vmem:[#allocation5 + $0x68] sm:$0xff]
    %v192 = vld [vmem:[#allocation5 + $0x70] sm:$0xff]
    %v193 = vld [vmem:[#allocation5 + $0x78] sm:$0xff]
    %v194 = vld [vmem:[#allocation5 + $0x80] sm:$0xff]
    %v195 = vld [vmem:[#allocation5 + $0x88] sm:$0xff]
    %v196 = vld [vmem:[#allocation5 + $0x90] sm:$0xff]
    %v197 = vld [vmem:[#allocation5 + $0x98] sm:$0xff]
    %v198 = vld [vmem:[#allocation5 + $0xa0] sm:$0xff]
    %v199 = vld [vmem:[#allocation5 + $0xa8] sm:$0xff]
    %v200 = vld [vmem:[#allocation5 + $0xb0] sm:$0xff]
    %v201 = vld [vmem:[#allocation5 + $0xb8] sm:$0xff]
    %v202 = vld [vmem:[#allocation5 + $0xc0] sm:$0xff]
    %v203 = vld [vmem:[#allocation5 + $0xc8] sm:$0xff]
    %v204 = vld [vmem:[#allocation5 + $0xd0] sm:$0xff]
    %v205 = vld [vmem:[#allocation5 + $0xd8] sm:$0xff]
    %v206 = vld [vmem:[#allocation5 + $0xe0] sm:$0xff]
    %v207 = vld [vmem:[#allocation5 + $0xe8] sm:$0xff]
    %v208 = vld [vmem:[#allocation5 + $0xf0] sm:$0xff]
    %v209 = vld [vmem:[#allocation5 + $0xf8] sm:$0xff]
    %v210 = vld [vmem:[#allocation5 + $0x100] sm:$0xff]
    %v211 = vld [vmem:[#allocation5 + $0x108] sm:$0xff]
    %v212 = vld [vmem:[#allocation5 + $0x110] sm:$0xff]
    %v213 = vld [vmem:[#allocation5 + $0x118] sm:$0xff]
    %v214 = vld [vmem:[#allocation5 + $0x120] sm:$0xff]
    %v215 = vld [vmem:[#allocation5 + $0x128] sm:$0xff]
    %v216 = vld [vmem:[#allocation5 + $0x130] sm:$0xff]
    %v217 = vld [vmem:[#allocation5 + $0x138] sm:$0xff]
    %v218 = vld [vmem:[#allocation5 + $0x140] sm:$0xff]
    %v219 = vld [vmem:[#allocation5 + $0x148] sm:$0xff]
    %v220 = vld [vmem:[#allocation5 + $0x150] sm:$0xff]
    %v221 = vld [vmem:[#allocation5 + $0x158] sm:$0xff]
    %v222 = vld [vmem:[#allocation5 + $0x160] sm:$0xff]
    %v223 = vld [vmem:[#allocation5 + $0x168] sm:$0xff]
    %v224 = vld [vmem:[#allocation5 + $0x170] sm:$0xff]
    %v225 = vld [vmem:[#allocation5 + $0x178] sm:$0xff]
    %v226 = vld [vmem:[#allocation5 + $0x180] sm:$0xff]
    %v227 = vld [vmem:[#allocation5 + $0x188] sm:$0xff]
    %v228 = vld [vmem:[#allocation5 + $0x190] sm:$0xff]
    %v229 = vld [vmem:[#allocation5 + $0x198] sm:$0xff]
    %v230 = vld [vmem:[#allocation5 + $0x1a0] sm:$0xff]
    %v231 = vld [vmem:[#allocation5 + $0x1a8] sm:$0xff]
    %v232 = vld [vmem:[#allocation5 + $0x1b0] sm:$0xff]
    %v233 = vld [vmem:[#allocation5 + $0x1b8] sm:$0xff]
    %v234 = vld [vmem:[#allocation5 + $0x1c0] sm:$0xff]
    %v235 = vld [vmem:[#allocation5 + $0x1c8] sm:$0xff]
    %v236 = vld [vmem:[#allocation5 + $0x1d0] sm:$0xff]
    %v237 = vld [vmem:[#allocation5 + $0x1d8] sm:$0xff]
    %v238 = vld [vmem:[#allocation5 + $0x1e0] sm:$0xff]
    %v239 = vld [vmem:[#allocation5 + $0x1e8] sm:$0xff]
    %v240 = vld [vmem:[#allocation5 + $0x1f0] sm:$0xff]
    %v241 = vld [vmem:[#allocation5 + $0x1f8] sm:$0xff]
    %v242 = vld [vmem:[#allocation5 + $0x200] sm:$0xff]
    %v243 = vld [vmem:[#allocation5 + $0x208] sm:$0xff]
    %v244 = vld [vmem:[#allocation5 + $0x210] sm:$0xff]
    %v245 = vld [vmem:[#allocation5 + $0x218] sm:$0xff]
    %v246 = vld [vmem:[#allocation5 + $0x220] sm:$0xff]
    %v247 = vld [vmem:[#allocation5 + $0x228] sm:$0xff]
    %v248 = vld [vmem:[#allocation5 + $0x230] sm:$0xff]
    %v249 = vld [vmem:[#allocation5 + $0x238] sm:$0xff]
    %v250 = vld [vmem:[#allocation5 + $0x240] sm:$0xff]
    %v251 = vld [vmem:[#allocation5 + $0x248] sm:$0xff]
    %v252 = vld [vmem:[#allocation5 + $0x250] sm:$0xff]
    %v253 = vld [vmem:[#allocation5 + $0x258] sm:$0xff]
    %v254 = vld [vmem:[#allocation5 + $0x260] sm:$0xff]
    %v255 = vld [vmem:[#allocation5 + $0x268] sm:$0xff]
    %v256 = vld [vmem:[#allocation5 + $0x270] sm:$0xff]
    %v257 = vld [vmem:[#allocation5 + $0x278] sm:$0xff]
    %v258 = vld [vmem:[#allocation5 + $0x280] sm:$0xff]
    %v259 = vld [vmem:[#allocation5 + $0x288] sm:$0xff]
    %v260 = vld [vmem:[#allocation5 + $0x290] sm:$0xff]
    %v261 = vld [vmem:[#allocation5 + $0x298] sm:$0xff]
    %v262 = vld [vmem:[#allocation5 + $0x2a0] sm:$0xff]
    %v263 = vld [vmem:[#allocation5 + $0x2a8] sm:$0xff]
    %v264 = vld [vmem:[#allocation5 + $0x2b0] sm:$0xff]
    %v265 = vld [vmem:[#allocation5 + $0x2b8] sm:$0xff]
    %v266 = vld [vmem:[#allocation5 + $0x2c0] sm:$0xff]
    %v267 = vld [vmem:[#allocation5 + $0x2c8] sm:$0xff]
    %v268 = vld [vmem:[#allocation5 + $0x2d0] sm:$0xff]
    %v269 = vld [vmem:[#allocation5 + $0x2d8] sm:$0xff]
    %v270 = vld [vmem:[#allocation5 + $0x2e0] sm:$0xff]
    %v271 = vld [vmem:[#allocation5 + $0x2e8] sm:$0xff]
    %v272 = vld [vmem:[#allocation5 + $0x2f0] sm:$0xff]
    %v273 = vld [vmem:[#allocation5 + $0x2f8] sm:$0xff]
    %v274 = vld [vmem:[#allocation5 + $0x300] sm:$0xff]
    %v275 = vld [vmem:[#allocation5 + $0x308] sm:$0xff]
    %v276 = vld [vmem:[#allocation5 + $0x310] sm:$0xff]
    %v277 = vld [vmem:[#allocation5 + $0x318] sm:$0xff]
    %v278 = vld [vmem:[#allocation5 + $0x320] sm:$0xff]
    %v279 = vld [vmem:[#allocation5 + $0x328] sm:$0xff]
    %v280 = vld [vmem:[#allocation5 + $0x330] sm:$0xff]
    %v281 = vld [vmem:[#allocation5 + $0x338] sm:$0xff]
    %v282 = vld [vmem:[#allocation5 + $0x340] sm:$0xff]
    %v283 = vld [vmem:[#allocation5 + $0x348] sm:$0xff]
    %v284 = vld [vmem:[#allocation5 + $0x350] sm:$0xff]
    %v285 = vld [vmem:[#allocation5 + $0x358] sm:$0xff]
    %v286 = vld [vmem:[#allocation5 + $0x360] sm:$0xff]
    %v287 = vld [vmem:[#allocation5 + $0x368] sm:$0xff]
    %v288 = vld [vmem:[#allocation5 + $0x370] sm:$0xff]
    %v289 = vld [vmem:[#allocation5 + $0x378] sm:$0xff]
    %v290 = vld [vmem:[#allocation5 + $0x380] sm:$0xff]
    %v291 = vld [vmem:[#allocation5 + $0x388] sm:$0xff]
    %v292 = vld [vmem:[#allocation5 + $0x390] sm:$0xff]
    %v293 = vld [vmem:[#allocation5 + $0x398] sm:$0xff]
    %v294 = vld [vmem:[#allocation5 + $0x3a0] sm:$0xff]
    %v295 = vld [vmem:[#allocation5 + $0x3a8] sm:$0xff]
    %v296 = vld [vmem:[#allocation5 + $0x3b0] sm:$0xff]
    %v297 = vld [vmem:[#allocation5 + $0x3b8] sm:$0xff]
    %v298 = vld [vmem:[#allocation5 + $0x3c0] sm:$0xff]
    %v299 = vld [vmem:[#allocation5 + $0x3c8] sm:$0xff]
    %v300 = vld [vmem:[#allocation5 + $0x3d0] sm:$0xff]
    %v301 = vld [vmem:[#allocation5 + $0x3d8] sm:$0xff]
    %v302 = vld [vmem:[#allocation5 + $0x3e0] sm:$0xff]
    %v303 = vld [vmem:[#allocation5 + $0x3e8] sm:$0xff]
    %v304 = vld [vmem:[#allocation5 + $0x3f0] sm:$0xff]
    %v305 = vld [vmem:[#allocation5 + $0x3f8] sm:$0xff]
    %s306 = scalar_lea.vmem [#allocation5], 1024
    %v307 = vld [vmem:[%s306] sm:$0xff]
    %v308 = vld [vmem:[%s306 + $0x8] sm:$0xff]
    %v309 = vld [vmem:[%s306 + $0x10] sm:$0xff]
    %v310 = vld [vmem:[%s306 + $0x18] sm:$0xff]
    %v311 = vld [vmem:[%s306 + $0x20] sm:$0xff]
    %v312 = vld [vmem:[%s306 + $0x28] sm:$0xff]
    %v313 = vld [vmem:[%s306 + $0x30] sm:$0xff]
    %v314 = vld [vmem:[%s306 + $0x38] sm:$0xff]
    %v315 = vld [vmem:[%s306 + $0x40] sm:$0xff]
    %v316 = vld [vmem:[%s306 + $0x48] sm:$0xff]
    %v317 = vld [vmem:[%s306 + $0x50] sm:$0xff]
    %v318 = vld [vmem:[%s306 + $0x58] sm:$0xff]
    %v319 = vld [vmem:[%s306 + $0x60] sm:$0xff]
    %v320 = vld [vmem:[%s306 + $0x68] sm:$0xff]
    %v321 = vld [vmem:[%s306 + $0x70] sm:$0xff]
    %v322 = vld [vmem:[%s306 + $0x78] sm:$0xff]
    %v323 = vld [vmem:[%s306 + $0x80] sm:$0xff]
    %v324 = vld [vmem:[%s306 + $0x88] sm:$0xff]
    %v325 = vld [vmem:[%s306 + $0x90] sm:$0xff]
    %v326 = vld [vmem:[%s306 + $0x98] sm:$0xff]
    %v327 = vld [vmem:[%s306 + $0xa0] sm:$0xff]
    %v328 = vld [vmem:[%s306 + $0xa8] sm:$0xff]
    %v329 = vld [vmem:[%s306 + $0xb0] sm:$0xff]
    %v330 = vld [vmem:[%s306 + $0xb8] sm:$0xff]
    %v331 = vld [vmem:[%s306 + $0xc0] sm:$0xff]
    %v332 = vld [vmem:[%s306 + $0xc8] sm:$0xff]
    %v333 = vld [vmem:[%s306 + $0xd0] sm:$0xff]
    %v334 = vld [vmem:[%s306 + $0xd8] sm:$0xff]
    %v335 = vld [vmem:[%s306 + $0xe0] sm:$0xff]
    %v336 = vld [vmem:[%s306 + $0xe8] sm:$0xff]
    %v337 = vld [vmem:[%s306 + $0xf0] sm:$0xff]
    %v338 = vld [vmem:[%s306 + $0xf8] sm:$0xff]
    %v339 = vld [vmem:[%s306 + $0x100] sm:$0xff]
    %v340 = vld [vmem:[%s306 + $0x108] sm:$0xff]
    %v341 = vld [vmem:[%s306 + $0x110] sm:$0xff]
    %v342 = vld [vmem:[%s306 + $0x118] sm:$0xff]
    %v343 = vld [vmem:[%s306 + $0x120] sm:$0xff]
    %v344 = vld [vmem:[%s306 + $0x128] sm:$0xff]
    %v345 = vld [vmem:[%s306 + $0x130] sm:$0xff]
    %v346 = vld [vmem:[%s306 + $0x138] sm:$0xff]
    %v347 = vld [vmem:[%s306 + $0x140] sm:$0xff]
    %v348 = vld [vmem:[%s306 + $0x148] sm:$0xff]
    %v349 = vld [vmem:[%s306 + $0x150] sm:$0xff]
    %v350 = vld [vmem:[%s306 + $0x158] sm:$0xff]
    %v351 = vld [vmem:[%s306 + $0x160] sm:$0xff]
    %v352 = vld [vmem:[%s306 + $0x168] sm:$0xff]
    %v353 = vld [vmem:[%s306 + $0x170] sm:$0xff]
    %v354 = vld [vmem:[%s306 + $0x178] sm:$0xff]
    %v355 = vld [vmem:[%s306 + $0x180] sm:$0xff]
    %v356 = vld [vmem:[%s306 + $0x188] sm:$0xff]
    %v357 = vld [vmem:[%s306 + $0x190] sm:$0xff]
    %v358 = vld [vmem:[%s306 + $0x198] sm:$0xff]
    %v359 = vld [vmem:[%s306 + $0x1a0] sm:$0xff]
    %v360 = vld [vmem:[%s306 + $0x1a8] sm:$0xff]
    %v361 = vld [vmem:[%s306 + $0x1b0] sm:$0xff]
    %v362 = vld [vmem:[%s306 + $0x1b8] sm:$0xff]
    %v363 = vld [vmem:[%s306 + $0x1c0] sm:$0xff]
    %v364 = vld [vmem:[%s306 + $0x1c8] sm:$0xff]
    %v365 = vld [vmem:[%s306 + $0x1d0] sm:$0xff]
    %v366 = vld [vmem:[%s306 + $0x1d8] sm:$0xff]
    %v367 = vld [vmem:[%s306 + $0x1e0] sm:$0xff]
    %v368 = vld [vmem:[%s306 + $0x1e8] sm:$0xff]
    %v369 = vld [vmem:[%s306 + $0x1f0] sm:$0xff]
    %v370 = vld [vmem:[%s306 + $0x1f8] sm:$0xff]
    %v371 = vld [vmem:[%s306 + $0x200] sm:$0xff]
    %v372 = vld [vmem:[%s306 + $0x208] sm:$0xff]
    %v373 = vld [vmem:[%s306 + $0x210] sm:$0xff]
    %v374 = vld [vmem:[%s306 + $0x218] sm:$0xff]
    %v375 = vld [vmem:[%s306 + $0x220] sm:$0xff]
    %v376 = vld [vmem:[%s306 + $0x228] sm:$0xff]
    %v377 = vld [vmem:[%s306 + $0x230] sm:$0xff]
    %v378 = vld [vmem:[%s306 + $0x238] sm:$0xff]
    %v379 = vld [vmem:[%s306 + $0x240] sm:$0xff]
    %v380 = vld [vmem:[%s306 + $0x248] sm:$0xff]
    %v381 = vld [vmem:[%s306 + $0x250] sm:$0xff]
    %v382 = vld [vmem:[%s306 + $0x258] sm:$0xff]
    %v383 = vld [vmem:[%s306 + $0x260] sm:$0xff]
    %v384 = vld [vmem:[%s306 + $0x268] sm:$0xff]
    %v385 = vld [vmem:[%s306 + $0x270] sm:$0xff]
    %v386 = vld [vmem:[%s306 + $0x278] sm:$0xff]
    %v387 = vld [vmem:[%s306 + $0x280] sm:$0xff]
    %v388 = vld [vmem:[%s306 + $0x288] sm:$0xff]
    %v389 = vld [vmem:[%s306 + $0x290] sm:$0xff]
    %v390 = vld [vmem:[%s306 + $0x298] sm:$0xff]
    %v391 = vld [vmem:[%s306 + $0x2a0] sm:$0xff]
    %v392 = vld [vmem:[%s306 + $0x2a8] sm:$0xff]
    %v393 = vld [vmem:[%s306 + $0x2b0] sm:$0xff]
    %v394 = vld [vmem:[%s306 + $0x2b8] sm:$0xff]
    %v395 = vld [vmem:[%s306 + $0x2c0] sm:$0xff]
    %v396 = vld [vmem:[%s306 + $0x2c8] sm:$0xff]
    %v397 = vld [vmem:[%s306 + $0x2d0] sm:$0xff]
    %v398 = vld [vmem:[%s306 + $0x2d8] sm:$0xff]
    %v399 = vld [vmem:[%s306 + $0x2e0] sm:$0xff]
    %v400 = vld [vmem:[%s306 + $0x2e8] sm:$0xff]
    %v401 = vld [vmem:[%s306 + $0x2f0] sm:$0xff]
    %v402 = vld [vmem:[%s306 + $0x2f8] sm:$0xff]
    %v403 = vld [vmem:[%s306 + $0x300] sm:$0xff]
    %v404 = vld [vmem:[%s306 + $0x308] sm:$0xff]
    %v405 = vld [vmem:[%s306 + $0x310] sm:$0xff]
    %v406 = vld [vmem:[%s306 + $0x318] sm:$0xff]
    %v407 = vld [vmem:[%s306 + $0x320] sm:$0xff]
    %v408 = vld [vmem:[%s306 + $0x328] sm:$0xff]
    %v409 = vld [vmem:[%s306 + $0x330] sm:$0xff]
    %v410 = vld [vmem:[%s306 + $0x338] sm:$0xff]
    %v411 = vld [vmem:[%s306 + $0x340] sm:$0xff]
    %v412 = vld [vmem:[%s306 + $0x348] sm:$0xff]
    %v413 = vld [vmem:[%s306 + $0x350] sm:$0xff]
    %v414 = vld [vmem:[%s306 + $0x358] sm:$0xff]
    %v415 = vld [vmem:[%s306 + $0x360] sm:$0xff]
    %v416 = vld [vmem:[%s306 + $0x368] sm:$0xff]
    %v417 = vld [vmem:[%s306 + $0x370] sm:$0xff]
    %v418 = vld [vmem:[%s306 + $0x378] sm:$0xff]
    %v419 = vld [vmem:[%s306 + $0x380] sm:$0xff]
    %v420 = vld [vmem:[%s306 + $0x388] sm:$0xff]
    %v421 = vld [vmem:[%s306 + $0x390] sm:$0xff]
    %v422 = vld [vmem:[%s306 + $0x398] sm:$0xff]
    %v423 = vld [vmem:[%s306 + $0x3a0] sm:$0xff]
    %v424 = vld [vmem:[%s306 + $0x3a8] sm:$0xff]
    %v425 = vld [vmem:[%s306 + $0x3b0] sm:$0xff]
    %v426 = vld [vmem:[%s306 + $0x3b8] sm:$0xff]
    %v427 = vld [vmem:[%s306 + $0x3c0] sm:$0xff]
    %v428 = vld [vmem:[%s306 + $0x3c8] sm:$0xff]
    %v429 = vld [vmem:[%s306 + $0x3d0] sm:$0xff]
    %v430 = vld [vmem:[%s306 + $0x3d8] sm:$0xff]
    %v431 = vld [vmem:[%s306 + $0x3e0] sm:$0xff]
    %v432 = vld [vmem:[%s306 + $0x3e8] sm:$0xff]
    %v433 = vld [vmem:[%s306 + $0x3f0] sm:$0xff]
    %v434 = vld [vmem:[%s306 + $0x3f8] sm:$0xff]
    %vm443 = vcmask 1041409
    %v444 = vsel %vm443, %v156, %v128
    %v445 = vsel %vm443, %v163, %v135
    %v446 = vsel %vm443, %v170, %v142
    %v447 = vsel %vm443, %v177, %v149
    %452 = vmatprep.subr.mxu0 %v338
    %453 = vmatpush1.msra.mxu0 %v337
    %454 = vmatprep.subr.mxu0 %v336
    %455 = vmatpush1.msra.mxu0 %v335
    %456 = vmatprep.subr.mxu0 %v334
    %457 = vmatpush1.msra.mxu0 %v333
    %458 = vmatprep.subr.mxu0 %v332
    %459 = vmatpush1.msra.mxu0 %v331
    %460 = vmatprep.subr.mxu0 %v330
    %461 = vmatpush1.msra.mxu0 %v329
    %462 = vmatprep.subr.mxu0 %v328
    %463 = vmatpush1.msra.mxu0 %v327
    %464 = vmatprep.subr.mxu0 %v326
    %465 = vmatpush1.msra.mxu0 %v325
    %466 = vmatprep.subr.mxu0 %v324
    %467 = vmatpush1.msra.mxu0 %v323
    %468 = vmatprep.subr.mxu0 %v322
    %469 = vmatpush1.msra.mxu0 %v321
    %470 = vmatprep.subr.mxu0 %v320
    %471 = vmatpush1.msra.mxu0 %v319
    %472 = vmatprep.subr.mxu0 %v318
    %473 = vmatpush1.msra.mxu0 %v317
    %474 = vmatprep.subr.mxu0 %v316
    %475 = vmatpush1.msra.mxu0 %v315
    %476 = vmatprep.subr.mxu0 %v314
    %477 = vmatpush1.msra.mxu0 %v313
    %478 = vmatprep.subr.mxu0 %v312
    %479 = vmatpush1.msra.mxu0 %v311
    %480 = vmatprep.subr.mxu0 %v310
    %481 = vmatpush1.msra.mxu0 %v309
    %482 = vmatprep.subr.mxu0 %v308
    %483 = vmatpush1.msra.mxu0 %v307
    %484 = vmatprep.subr.mxu0 %v370
    %485 = vmatpush2.msra.mxu0 %v369
    %486 = vmatprep.subr.mxu0 %v368
    %487 = vmatpush2.msra.mxu0 %v367
    %488 = vmatprep.subr.mxu0 %v366
    %489 = vmatpush2.msra.mxu0 %v365
    %490 = vmatprep.subr.mxu0 %v364
    %491 = vmatpush2.msra.mxu0 %v363
    %492 = vmatprep.subr.mxu0 %v362
    %493 = vmatpush2.msra.mxu0 %v361
    %494 = vmatprep.subr.mxu0 %v360
    %495 = vmatpush2.msra.mxu0 %v359
    %496 = vmatprep.subr.mxu0 %v358
    %497 = vmatpush2.msra.mxu0 %v357
    %498 = vmatprep.subr.mxu0 %v356
    %499 = vmatpush2.msra.mxu0 %v355
    %500 = vmatprep.subr.mxu0 %v354
    %501 = vmatpush2.msra.mxu0 %v353
    %502 = vmatprep.subr.mxu0 %v352
    %503 = vmatpush2.msra.mxu0 %v351
    %504 = vmatprep.subr.mxu0 %v350
    %505 = vmatpush2.msra.mxu0 %v349
    %506 = vmatprep.subr.mxu0 %v348
    %507 = vmatpush2.msra.mxu0 %v347
    %508 = vmatprep.subr.mxu0 %v346
    %509 = vmatpush2.msra.mxu0 %v345
    %510 = vmatprep.subr.mxu0 %v344
    %511 = vmatpush2.msra.mxu0 %v343
    %512 = vmatprep.subr.mxu0 %v342
    %513 = vmatpush2.msra.mxu0 %v341
    %514 = vmatprep.subr.mxu0 %v340
    %515 = vmatpush2.msra.mxu0 %v339
    %516 = vmatprep.mubr.f32.mxu0 %v445
    %517 = vmatmul.mubr.f32.gmra.mxu0 %v444
    %v518 = vpop.f32.mrf.mxu0
    %v519 = vadd.f32 0.0, %v518
    %v520 = vpop.f32.mrf.mxu0
    %v521 = vadd.f32 0.0, %v520
    %522 = vdwg.mxu0
    %523 = vmatprep.subr.mxu0 %v402
    %524 = vmatpush1.msra.mxu0 %v401
    %525 = vmatprep.subr.mxu0 %v400
    %526 = vmatpush1.msra.mxu0 %v399
    %527 = vmatprep.subr.mxu0 %v398
    %528 = vmatpush1.msra.mxu0 %v397
    %529 = vmatprep.subr.mxu0 %v396
    %530 = vmatpush1.msra.mxu0 %v395
    %531 = vmatprep.subr.mxu0 %v394
    %532 = vmatpush1.msra.mxu0 %v393
    %533 = vmatprep.subr.mxu0 %v392
    %534 = vmatpush1.msra.mxu0 %v391
    %535 = vmatprep.subr.mxu0 %v390
    %536 = vmatpush1.msra.mxu0 %v389
    %537 = vmatprep.subr.mxu0 %v388
    %538 = vmatpush1.msra.mxu0 %v387
    %539 = vmatprep.subr.mxu0 %v386
    %540 = vmatpush1.msra.mxu0 %v385
    %541 = vmatprep.subr.mxu0 %v384
    %542 = vmatpush1.msra.mxu0 %v383
    %543 = vmatprep.subr.mxu0 %v382
    %544 = vmatpush1.msra.mxu0 %v381
    %545 = vmatprep.subr.mxu0 %v380
    %546 = vmatpush1.msra.mxu0 %v379
    %547 = vmatprep.subr.mxu0 %v378
    %548 = vmatpush1.msra.mxu0 %v377
    %549 = vmatprep.subr.mxu0 %v376
    %550 = vmatpush1.msra.mxu0 %v375
    %551 = vmatprep.subr.mxu0 %v374
    %552 = vmatpush1.msra.mxu0 %v373
    %553 = vmatprep.subr.mxu0 %v372
    %554 = vmatpush1.msra.mxu0 %v371
    %555 = vmatprep.subr.mxu0 %v434
    %556 = vmatpush2.msra.mxu0 %v433
    %557 = vmatprep.subr.mxu0 %v432
    %558 = vmatpush2.msra.mxu0 %v431
    %559 = vmatprep.subr.mxu0 %v430
    %560 = vmatpush2.msra.mxu0 %v429
    %561 = vmatprep.subr.mxu0 %v428
    %562 = vmatpush2.msra.mxu0 %v427
    %563 = vmatprep.subr.mxu0 %v426
    %564 = vmatpush2.msra.mxu0 %v425
    %565 = vmatprep.subr.mxu0 %v424
    %566 = vmatpush2.msra.mxu0 %v423
    %567 = vmatprep.subr.mxu0 %v422
    %568 = vmatpush2.msra.mxu0 %v421
    %569 = vmatprep.subr.mxu0 %v420
    %570 = vmatpush2.msra.mxu0 %v419
    %571 = vmatprep.subr.mxu0 %v418
    %572 = vmatpush2.msra.mxu0 %v417
    %573 = vmatprep.subr.mxu0 %v416
    %574 = vmatpush2.msra.mxu0 %v415
    %575 = vmatprep.subr.mxu0 %v414
    %576 = vmatpush2.msra.mxu0 %v413
    %577 = vmatprep.subr.mxu0 %v412
    %578 = vmatpush2.msra.mxu0 %v411
    %579 = vmatprep.subr.mxu0 %v410
    %580 = vmatpush2.msra.mxu0 %v409
    %581 = vmatprep.subr.mxu0 %v408
    %582 = vmatpush2.msra.mxu0 %v407
    %583 = vmatprep.subr.mxu0 %v406
    %584 = vmatpush2.msra.mxu0 %v405
    %585 = vmatprep.subr.mxu0 %v404
    %586 = vmatpush2.msra.mxu0 %v403
    %587 = vmatprep.mubr.f32.mxu0 %v447
    %588 = vmatmul.mubr.f32.gmra.mxu0 %v446
    %v589 = vpop.f32.mrf.mxu0
    %v590 = vadd.f32 %v519, %v589
    %v591 = vpop.f32.mrf.mxu0
    %v592 = vadd.f32 %v521, %v591
    %593 = vdwg.mxu0
    %v602 = vsel %vm443, %v118, %v114
    %v603 = vsel %vm443, %v119, %v115
    %v604 = vsel %vm443, %v120, %v116
    %v605 = vsel %vm443, %v121, %v117
    %610 = vmatprep.subr.mxu0 %v209
    %611 = vmatpush1.msra.mxu0 %v208
    %612 = vmatprep.subr.mxu0 %v207
    %613 = vmatpush1.msra.mxu0 %v206
    %614 = vmatprep.subr.mxu0 %v205
    %615 = vmatpush1.msra.mxu0 %v204
    %616 = vmatprep.subr.mxu0 %v203
    %617 = vmatpush1.msra.mxu0 %v202
    %618 = vmatprep.subr.mxu0 %v201
    %619 = vmatpush1.msra.mxu0 %v200
    %620 = vmatprep.subr.mxu0 %v199
    %621 = vmatpush1.msra.mxu0 %v198
    %622 = vmatprep.subr.mxu0 %v197
    %623 = vmatpush1.msra.mxu0 %v196
    %624 = vmatprep.subr.mxu0 %v195
    %625 = vmatpush1.msra.mxu0 %v194
    %626 = vmatprep.subr.mxu0 %v193
    %627 = vmatpush1.msra.mxu0 %v192
    %628 = vmatprep.subr.mxu0 %v191
    %629 = vmatpush1.msra.mxu0 %v190
    %630 = vmatprep.subr.mxu0 %v189
    %631 = vmatpush1.msra.mxu0 %v188
    %632 = vmatprep.subr.mxu0 %v187
    %633 = vmatpush1.msra.mxu0 %v186
    %634 = vmatprep.subr.mxu0 %v185
    %635 = vmatpush1.msra.mxu0 %v184
    %636 = vmatprep.subr.mxu0 %v183
    %637 = vmatpush1.msra.mxu0 %v182
    %638 = vmatprep.subr.mxu0 %v181
    %639 = vmatpush1.msra.mxu0 %v180
    %640 = vmatprep.subr.mxu0 %v179
    %641 = vmatpush1.msra.mxu0 %v178
    %642 = vmatprep.subr.mxu0 %v241
    %643 = vmatpush2.msra.mxu0 %v240
    %644 = vmatprep.subr.mxu0 %v239
    %645 = vmatpush2.msra.mxu0 %v238
    %646 = vmatprep.subr.mxu0 %v237
    %647 = vmatpush2.msra.mxu0 %v236
    %648 = vmatprep.subr.mxu0 %v235
    %649 = vmatpush2.msra.mxu0 %v234
    %650 = vmatprep.subr.mxu0 %v233
    %651 = vmatpush2.msra.mxu0 %v232
    %652 = vmatprep.subr.mxu0 %v231
    %653 = vmatpush2.msra.mxu0 %v230
    %654 = vmatprep.subr.mxu0 %v229
    %655 = vmatpush2.msra.mxu0 %v228
    %656 = vmatprep.subr.mxu0 %v227
    %657 = vmatpush2.msra.mxu0 %v226
    %658 = vmatprep.subr.mxu0 %v225
    %659 = vmatpush2.msra.mxu0 %v224
    %660 = vmatprep.subr.mxu0 %v223
    %661 = vmatpush2.msra.mxu0 %v222
    %662 = vmatprep.subr.mxu0 %v221
    %663 = vmatpush2.msra.mxu0 %v220
    %664 = vmatprep.subr.mxu0 %v219
    %665 = vmatpush2.msra.mxu0 %v218
    %666 = vmatprep.subr.mxu0 %v217
    %667 = vmatpush2.msra.mxu0 %v216
    %668 = vmatprep.subr.mxu0 %v215
    %669 = vmatpush2.msra.mxu0 %v214
    %670 = vmatprep.subr.mxu0 %v213
    %671 = vmatpush2.msra.mxu0 %v212
    %672 = vmatprep.subr.mxu0 %v211
    %673 = vmatpush2.msra.mxu0 %v210
    %674 = vmatprep.mubr.f32.mxu0 %v603
    %675 = vmatmul.mubr.f32.gmra.mxu0 %v602
    %v676 = vpop.f32.mrf.mxu0
    %v677 = vadd.f32 %v590, %v676
    %v678 = vpop.f32.mrf.mxu0
    %v679 = vadd.f32 %v592, %v678
    %680 = vdwg.mxu0
    %681 = vmatprep.subr.mxu0 %v273
    %682 = vmatpush1.msra.mxu0 %v272
    %683 = vmatprep.subr.mxu0 %v271
    %684 = vmatpush1.msra.mxu0 %v270
    %685 = vmatprep.subr.mxu0 %v269
    %686 = vmatpush1.msra.mxu0 %v268
    %687 = vmatprep.subr.mxu0 %v267
    %688 = vmatpush1.msra.mxu0 %v266
    %689 = vmatprep.subr.mxu0 %v265
    %690 = vmatpush1.msra.mxu0 %v264
    %691 = vmatprep.subr.mxu0 %v263
    %692 = vmatpush1.msra.mxu0 %v262
    %693 = vmatprep.subr.mxu0 %v261
    %694 = vmatpush1.msra.mxu0 %v260
    %695 = vmatprep.subr.mxu0 %v259
    %696 = vmatpush1.msra.mxu0 %v258
    %697 = vmatprep.subr.mxu0 %v257
    %698 = vmatpush1.msra.mxu0 %v256
    %699 = vmatprep.subr.mxu0 %v255
    %700 = vmatpush1.msra.mxu0 %v254
    %701 = vmatprep.subr.mxu0 %v253
    %702 = vmatpush1.msra.mxu0 %v252
    %703 = vmatprep.subr.mxu0 %v251
    %704 = vmatpush1.msra.mxu0 %v250
    %705 = vmatprep.subr.mxu0 %v249
    %706 = vmatpush1.msra.mxu0 %v248
    %707 = vmatprep.subr.mxu0 %v247
    %708 = vmatpush1.msra.mxu0 %v246
    %709 = vmatprep.subr.mxu0 %v245
    %710 = vmatpush1.msra.mxu0 %v244
    %711 = vmatprep.subr.mxu0 %v243
    %712 = vmatpush1.msra.mxu0 %v242
    %713 = vmatprep.subr.mxu0 %v305
    %714 = vmatpush2.msra.mxu0 %v304
    %715 = vmatprep.subr.mxu0 %v303
    %716 = vmatpush2.msra.mxu0 %v302
    %717 = vmatprep.subr.mxu0 %v301
    %718 = vmatpush2.msra.mxu0 %v300
    %719 = vmatprep.subr.mxu0 %v299
    %720 = vmatpush2.msra.mxu0 %v298
    %721 = vmatprep.subr.mxu0 %v297
    %722 = vmatpush2.msra.mxu0 %v296
    %723 = vmatprep.subr.mxu0 %v295
    %724 = vmatpush2.msra.mxu0 %v294
    %725 = vmatprep.subr.mxu0 %v293
    %726 = vmatpush2.msra.mxu0 %v292
    %727 = vmatprep.subr.mxu0 %v291
    %728 = vmatpush2.msra.mxu0 %v290
    %729 = vmatprep.subr.mxu0 %v289
    %730 = vmatpush2.msra.mxu0 %v288
    %731 = vmatprep.subr.mxu0 %v287
    %732 = vmatpush2.msra.mxu0 %v286
    %733 = vmatprep.subr.mxu0 %v285
    %734 = vmatpush2.msra.mxu0 %v284
    %735 = vmatprep.subr.mxu0 %v283
    %736 = vmatpush2.msra.mxu0 %v282
    %737 = vmatprep.subr.mxu0 %v281
    %738 = vmatpush2.msra.mxu0 %v280
    %739 = vmatprep.subr.mxu0 %v279
    %740 = vmatpush2.msra.mxu0 %v278
    %741 = vmatprep.subr.mxu0 %v277
    %742 = vmatpush2.msra.mxu0 %v276
    %743 = vmatprep.subr.mxu0 %v275
    %744 = vmatpush2.msra.mxu0 %v274
    %745 = vmatprep.mubr.f32.mxu0 %v605
    %746 = vmatmul.mubr.f32.gmra.mxu0 %v604
    %v747 = vpop.f32.mrf.mxu0
    %v748 = vadd.f32 %v677, %v747
    %v749 = vpop.f32.mrf.mxu0
    %v750 = vadd.f32 %v679, %v749
    %751 = vdwg.mxu0
    %v752 = vsub.f32 0.0, %v748
    %v753 = vsub.f32 0.0, %v750
    %v754 = vmul.f32 %v752, 1.442695
    %v755 = vpow.pop %v754
    %v756 = vmul.f32 %v753, 1.442695
    %v757 = vpow.pop %v756
    %v758 = vadd.f32 %v755, 1.0
    %v759 = vadd.f32 %v757, 1.0
    %v760 = vrcp.pop %v758
    %v761 = vmul.f32 1.0, %v760
    %v762 = vrcp.pop %v759
    %v763 = vmul.f32 1.0, %v762
    %v766 = vcombine.low %v761, %v763
    %v768 = vunpack.c.l.s4 1983009808
    %v769 = vunpack.c.0.s8 %v768
    %v770 = vlaneseq
    %v771 = vshrl.u32 %v770, 7
    %v772 = vsub.s32 %v769, %v771
    %v773 = vrot.slane %v766, %v772
    %775 = vst [vmem:[#allocation7] sm:$0xf] %v773
    // Predicated region
    $region18: #{tpu_custom_call.1} parent=1 // pred_check
      _
    $region19: #{tpu_custom_call.1} parent=1 // pred_check_branch
      %777 = sbr.rel (0) target = $region21
    $region20: #{tpu_custom_call.1} parent=1 // pred_region
      %s779 = ssub.s32 64, 64
      %780 = vsyncadd [#allocation4], %s779
      %s782 = sshll.u32 [#allocation7], 4
      %s783 = int_to_ptr.vmem [resolvable:$true] %s782
      %785 = dma.vmem_to_hbm [thread:$0]  %s783, 64, %s2, [#allocation4]
    $region21: #{tpu_custom_call.1} parent=1 // pred_fallthru
      _
    // Predicated region
    $region22: #{tpu_custom_call.1} parent=1 // pred_check
      _
    $region23: #{tpu_custom_call.1} parent=1 // pred_check_branch
      %787 = sbr.rel (0) target = $region25
    $region24: #{tpu_custom_call.1} parent=1 // pred_region
      %788 = dma.done [#allocation4], 64
    $region25: #{tpu_custom_call.1} parent=1 // pred_fallthru
      _
    %789 = vsyncpa [#allocation3], 1
    %790 = vsyncpa [#allocation6], 1
    %791 = vsyncpa [#allocation4], 1

</llo_original>
